<compile_context>
chip_gen: v7x
topology: tpu7x:2x2x1
jax: 0.10.0
libtpu: 0.0.40
codegen_flags: <defaults>
</compile_context>

<pallas_src>
import math
from functools import partial

import jax
import jax.numpy as jnp
from jax.experimental import pallas as pl
from jax.experimental.pallas import tpu as pltpu

NEG_INF = -1e30


# ----------------------------- small helpers ---------------------------------

def _round_up(x, m):
    return (x + m - 1) // m * m


def _pick_tile(total, cap):
    """Largest tile <= cap that divides `total` (halve until it divides)."""
    t = min(cap, total)
    while total % t:
        t //= 2
    return max(t, 1)


def _nbytes(shape, dtype):
    n = 1
    for s in shape:
        n *= int(s)
    return n * jnp.dtype(dtype).itemsize


def _vmem_limit(block_bytes):
    """Explicit scoped-VMEM limit: ~2x (double buffering) + headroom, clamped to stay
    inside every generation's physical VMEM (v7x: 64 MiB)."""
    return int(min(max(2 * block_bytes + (4 << 20), 16 << 20), 60 << 20))


def _layernorm(x, gamma, beta, eps=1e-5):
    # f32 statistics; elementwise math stays f32 (v5e VPU has no bf16).
    mu = jnp.mean(x, axis=-1, keepdims=True)
    var = jnp.mean((x - mu) ** 2, axis=-1, keepdims=True)
    return (x - mu) * jax.lax.rsqrt(var + eps) * gamma + beta


def _layernorm_nobias(x, gamma, eps=1e-5):
    mu = jnp.mean(x, axis=-1, keepdims=True)
    var = jnp.mean((x - mu) ** 2, axis=-1, keepdims=True)
    return (x - mu) * jax.lax.rsqrt(var + eps) * gamma


# ----------------------------- kernels ----------------------------------------

def qkv_proj_kernel(x_ref, g_ref, b_ref, wqkv_ref, qg_ref, kg_ref,
                    q_out, k_out, v_out, *, n_heads, q_scale):
    """Fused pre-LN + fused QKV projection + q/k LayerNorm for one (batch, L-tile).

    Writes q/k/v head-major (H, Lt, Dh) so the flash kernel never re-splits heads
    per KV step.  The 1/sqrt(Dh) softmax scale is folded into q here."""
    x = x_ref[0]                                          # (Lt, D) f32
    _, d = x.shape
    dh = d // n_heads

    xn = _layernorm(x, g_ref[...], b_ref[...]).astype(jnp.bfloat16)
    qkv = jnp.dot(xn, wqkv_ref[...], preferred_element_type=jnp.float32)   # (Lt, 3D)

    q = _layernorm_nobias(qkv[:, :d], qg_ref[...]) * q_scale
    k = _layernorm_nobias(qkv[:, d:2 * d], kg_ref[...])
    v = qkv[:, 2 * d:]

    for h in range(n_heads):                              # one-time head split per token tile
        sl = slice(h * dh, (h + 1) * dh)
        q_out[0, h] = q[:, sl].astype(jnp.bfloat16)
        k_out[0, h] = k[:, sl].astype(jnp.bfloat16)
        v_out[0, h] = v[:, sl].astype(jnp.bfloat16)


def flash_attn_kernel(q_ref, k_ref, v_ref, mask_ref, x_ref, wo_ref,
                      o_ref, m_sc, l_sc, acc_sc, *, inv_res_scale):
    """Flash-style attention + fused out-projection + residual add.

    grid = (batch, q_tile, kv_tile); kv axis is last/"arbitrary".  Softmax stats and
    the unnormalized output accumulate in VMEM scratch; normalization is deferred
    to the finalize step (single EUP reciprocal per row)."""
    kv = pl.program_id(2)

    @pl.when(kv == 0)
    def _():
        m_sc[...] = jnp.full(m_sc.shape, NEG_INF, jnp.float32)
        l_sc[...] = jnp.zeros(l_sc.shape, jnp.float32)
        acc_sc[...] = jnp.zeros(acc_sc.shape, jnp.float32)

    q = q_ref[0]                                          # (H, Tq, Dh) bf16 (scale folded)
    k = k_ref[0]                                          # (H, Tk, Dh) bf16
    v = v_ref[0]                                          # (H, Tk, Dh) bf16
    mask = mask_ref[0, 0] != 0                            # (Tq, Tk) bool, int8 in HBM

    s = jnp.einsum("hqd,hkd->hqk", q, k, preferred_element_type=jnp.float32)
    s = jnp.where(mask[None, :, :], s, NEG_INF)

    m_prev = m_sc[...]
    m_new = jnp.maximum(m_prev, jnp.max(s, axis=-1, keepdims=True))
    alpha = jnp.exp(m_prev - m_new)
    p = jnp.exp(s - m_new)                                # unnormalized probabilities
    l_sc[...] = alpha * l_sc[...] + jnp.sum(p, axis=-1, keepdims=True)
    acc_sc[...] = alpha * acc_sc[...] + jnp.einsum(
        "hqk,hkd->hqd", p.astype(jnp.bfloat16), v, preferred_element_type=jnp.float32)
    m_sc[...] = m_new

    @pl.when(kv == pl.num_programs(2) - 1)
    def _():
        # Deferred softmax normalization, then per-head out-projection accumulation:
        # no (L, D) attention scratch, no sub-128-lane column stores.
        acc = acc_sc[...] * pl.reciprocal(l_sc[...], approx=True)   # (H, Tq, Dh)
        n_heads, t_q, _ = acc.shape
        d_model = wo_ref.shape[-1]
        out = jnp.zeros((t_q, d_model), jnp.float32)
        for h in range(n_heads):
            out = out + jnp.dot(acc[h].astype(jnp.bfloat16), wo_ref[h],
                                preferred_element_type=jnp.float32)
        o_ref[0] = x_ref[0] + out * inv_res_scale          # fused residual add


def swiglu_ffn_kernel(x_ref, g_ref, b_ref, wg_ref, wu_ref, wd_ref,
                      o_ref, xn_sc, acc_sc, *, inv_res_scale):
    """Fused LN + SwiGLU FFN with the hidden dim tiled on the last ("arbitrary")
    grid axis; the down-projection accumulates in f32 VMEM scratch."""
    j = pl.program_id(2)

    @pl.when(j == 0)
    def _():
        xn_sc[...] = _layernorm(x_ref[0], g_ref[...], b_ref[...]).astype(jnp.bfloat16)
        acc_sc[...] = jnp.zeros(acc_sc.shape, jnp.float32)

    xn = xn_sc[...]
    gate = jnp.dot(xn, wg_ref[...], preferred_element_type=jnp.float32)
    up = jnp.dot(xn, wu_ref[...], preferred_element_type=jnp.float32)
    act = (gate * jax.nn.sigmoid(gate) * up).astype(jnp.bfloat16)      # SiLU(x1) * x2
    acc_sc[...] += jnp.dot(act, wd_ref[...], preferred_element_type=jnp.float32)

    @pl.when(j == pl.num_programs(2) - 1)
    def _():
        o_ref[0] = x_ref[0] + acc_sc[...] * inv_res_scale              # fused residual add


# ----------------------------- wrapper ----------------------------------------

def unified_transformer_block(params, x, attention_mask, blocks=None,
                              scaling_factor=1.0, position=None, kv_mat=None,
                              atom_mask=None):
    """x: [B, L, D] float32.  attention_mask: [B, 1, L, L] bool (True = attend)."""
    del position, kv_mat, atom_mask   # unused (standard-attention path only)

    B, L, D = x.shape
    H = int(params["n_heads"])
    Dh = D // H
    hidden = int(params["hidden"])
    inv_s = 1.0 / float(scaling_factor)
    f32, bf16 = jnp.float32, jnp.bfloat16

    # ---- sequence tiling: padding-based (no divisibility luck) ----
    LT = 128 if L >= 128 else _round_up(L, 8)
    Lp = _round_up(L, LT)
    n_lt = Lp // LT
    if Lp != L:
        x_p = jnp.pad(x, ((0, 0), (0, Lp - L), (0, 0)))
        mask_p = jnp.pad(attention_mask, ((0, 0), (0, 0), (0, Lp - L), (0, Lp - L)))
    else:
        x_p, mask_p = x, attention_mask
    mask_i8 = mask_p.astype(jnp.int8)                     # 1-byte mask; bias built in-kernel

    # ---- hidden tiling for the FFN ----
    NH = _pick_tile(hidden, 1024)
    n_ht = hidden // NH

    # ============ kernel 1: fused LN + QKV projection + q/k LN (head-major out) ============
    k1_bytes = (_nbytes((LT, D), f32) + 4 * _nbytes((1, D), f32)
                + _nbytes((D, 3 * D), bf16) + 3 * _nbytes((H, LT, Dh), bf16))
    q_hm, k_hm, v_hm = pl.pallas_call(
        partial(qkv_proj_kernel, n_heads=H, q_scale=1.0 / math.sqrt(Dh)),
        grid=(B, n_lt),
        in_specs=[
            pl.BlockSpec((1, LT, D), lambda b, l: (b, l, 0)),      # x
            pl.BlockSpec((1, D), lambda b, l: (0, 0)),             # attn LN gamma
            pl.BlockSpec((1, D), lambda b, l: (0, 0)),             # attn LN beta
            pl.BlockSpec((D, 3 * D), lambda b, l: (0, 0)),         # fused W_qkv (bf16)
            pl.BlockSpec((1, D), lambda b, l: (0, 0)),             # q LN gamma
            pl.BlockSpec((1, D), lambda b, l: (0, 0)),             # k LN gamma
        ],
        out_specs=[pl.BlockSpec((1, H, LT, Dh), lambda b, l: (b, 0, l, 0))] * 3,
        out_shape=[jax.ShapeDtypeStruct((B, H, Lp, Dh), bf16)] * 3,
        compiler_params=pltpu.CompilerParams(
            dimension_semantics=("parallel", "parallel"),
            vmem_limit_bytes=_vmem_limit(k1_bytes)),
        cost_estimate=pl.CostEstimate(
            flops=6 * B * Lp * D * D, transcendentals=0,
            bytes_accessed=B * Lp * D * 4 + 3 * D * D * 2 + 3 * B * Lp * D * 2),
    )(x_p, params["attn_ln_g"], params["attn_ln_b"], params["w_qkv"],
      params["q_ln_g"], params["k_ln_g"])

    # ============ kernel 2: flash attention + out-proj + residual ============
    k2_bytes = (3 * _nbytes((H, LT, Dh), bf16) + _nbytes((LT, LT), jnp.int8)
                + 2 * _nbytes((LT, D), f32) + _nbytes((H, Dh, D), bf16)
                + _nbytes((H, LT, Dh), f32) + 2 * _nbytes((H, LT, 1), f32))
    x_attn = pl.pallas_call(
        partial(flash_attn_kernel, inv_res_scale=inv_s),
        grid=(B, n_lt, n_lt),
        in_specs=[
            pl.BlockSpec((1, H, LT, Dh), lambda b, qi, ki: (b, 0, qi, 0)),   # q
            pl.BlockSpec((1, H, LT, Dh), lambda b, qi, ki: (b, 0, ki, 0)),   # k
            pl.BlockSpec((1, H, LT, Dh), lambda b, qi, ki: (b, 0, ki, 0)),   # v
            pl.BlockSpec((1, 1, LT, LT), lambda b, qi, ki: (b, 0, qi, ki)),  # mask tile
            pl.BlockSpec((1, LT, D), lambda b, qi, ki: (b, qi, 0)),          # residual x
            pl.BlockSpec((H, Dh, D), lambda b, qi, ki: (0, 0, 0)),           # W_out (head-major)
        ],
        out_specs=pl.BlockSpec((1, LT, D), lambda b, qi, ki: (b, qi, 0)),
        out_shape=jax.ShapeDtypeStruct((B, Lp, D), f32),
        scratch_shapes=[pltpu.VMEM((H, LT, 1), f32),      # running max m
                        pltpu.VMEM((H, LT, 1), f32),      # running denom l
                        pltpu.VMEM((H, LT, Dh), f32)],    # unnormalized output acc
        compiler_params=pltpu.CompilerParams(
            dimension_semantics=("parallel", "parallel", "arbitrary"),
            vmem_limit_bytes=_vmem_limit(k2_bytes)),
        cost_estimate=pl.CostEstimate(
            flops=B * (4 * Lp * Lp * D + 2 * Lp * D * D),
            transcendentals=B * H * Lp * Lp,
            bytes_accessed=3 * B * Lp * D * 2 + B * Lp * Lp + 2 * B * Lp * D * 4 + D * D * 2),
    )(q_hm, k_hm, v_hm, mask_i8, x_p, params["w_out"])

    # ============ kernel 3: fused LN + SwiGLU FFN (hidden-tiled) + residual ============
    k3_bytes = (2 * _nbytes((LT, D), f32) + 2 * _nbytes((1, D), f32)
                + 2 * _nbytes((D, NH), bf16) + _nbytes((NH, D), bf16)
                + _nbytes((LT, D), bf16) + _nbytes((LT, D), f32))
    x_out = pl.pallas_call(
        partial(swiglu_ffn_kernel, inv_res_scale=inv_s),
        grid=(B, n_lt, n_ht),
        in_specs=[
            pl.BlockSpec((1, LT, D), lambda b, l, j: (b, l, 0)),   # x (residual + LN input)
            pl.BlockSpec((1, D), lambda b, l, j: (0, 0)),          # ffn LN gamma
            pl.BlockSpec((1, D), lambda b, l, j: (0, 0)),          # ffn LN beta
            pl.BlockSpec((D, NH), lambda b, l, j: (0, j)),         # W_gate column block
            pl.BlockSpec((D, NH), lambda b, l, j: (0, j)),         # W_up   column block
            pl.BlockSpec((NH, D), lambda b, l, j: (j, 0)),         # W_down row block
        ],
        out_specs=pl.BlockSpec((1, LT, D), lambda b, l, j: (b, l, 0)),
        out_shape=jax.ShapeDtypeStruct((B, Lp, D), f32),
        scratch_shapes=[pltpu.VMEM((LT, D), bf16),        # cached LN(x)
                        pltpu.VMEM((LT, D), f32)],        # down-proj accumulator
        compiler_params=pltpu.CompilerParams(
            dimension_semantics=("parallel", "parallel", "arbitrary"),
            vmem_limit_bytes=_vmem_limit(k3_bytes)),
        cost_estimate=pl.CostEstimate(
            flops=6 * B * Lp * D * hidden,
            transcendentals=B * Lp * hidden,
            bytes_accessed=2 * B * Lp * D * 4 + 3 * D * hidden * 2),
    )(x_attn, params["ffn_ln_g"], params["ffn_ln_b"],
      params["w_gate"], params["w_up"], params["w_down"])

    if Lp != L:
        x_out = x_out[:, :L, :]
    return x_out, blocks


# ----------------------------- parameter init ---------------------------------

def swiglu_correction_fn(expansion_ratio: float, d_model: int) -> int:
    return int((expansion_ratio * d_model + 255) // 256 * 256)


def init_params(key, d_model, n_heads, expansion_ratio=4.0):
    hidden = swiglu_correction_fn(expansion_ratio, d_model)
    dh = d_model // n_heads
    ks = jax.random.split(key, 5)
    scale = 0.02
    f32, bf16 = jnp.float32, jnp.bfloat16

    def w(k, shape):
        return (scale * jax.random.normal(k, shape, f32)).astype(bf16)

    return {
        "n_heads": n_heads,
        "hidden": hidden,
        # attention
        "attn_ln_g": jnp.ones((1, d_model), f32),
        "attn_ln_b": jnp.zeros((1, d_model), f32),
        # fused qkv: y = x @ w_qkv, columns = [q | k | v]
        "w_qkv": w(ks[0], (d_model, 3 * d_model)),
        "q_ln_g": jnp.ones((1, d_model), f32),
        "k_ln_g": jnp.ones((1, d_model), f32),
        # out-proj stored head-major (H, Dh, D): rows h*Dh:(h+1)*Dh of the (D, D) weight.
        "w_out": w(ks[1], (d_model, d_model)).reshape(n_heads, dh, d_model),
        # ffn (Linear(d, 2*hidden) pre-split: first half = gate, second half = up)
        "ffn_ln_g": jnp.ones((1, d_model), f32),
        "ffn_ln_b": jnp.zeros((1, d_model), f32),
        "w_gate": w(ks[2], (d_model, hidden)),
        "w_up": w(ks[3], (d_model, hidden)),
        "w_down": w(ks[4], (hidden, d_model)),
    }


# ----------------------------- main --------------------------------------------

if __name__ == "__main__":
    B, L, D, H = 2, 8, 32, 4

    key = jax.random.PRNGKey(0)
    k_param, k_x = jax.random.split(key)

    params = init_params(k_param, D, H)
    x = jax.random.normal(k_x, (B, L, D), jnp.float32)
    # attend-to-all boolean mask (True = attend); shape [B, 1, L, L]
    attention_mask = jnp.ones((B, 1, L, L), dtype=bool)

    out, blocks = unified_transformer_block(params, x, attention_mask, blocks=None)
    out = jax.block_until_ready(out)

    assert out.shape == (B, L, D)
    assert bool(jnp.all(jnp.isfinite(out)))
    print("KERNEL_OK")
</pallas_src>

<mosaic_0001>
module attributes {stable_mosaic.version = 11 : i64} {
  func.func @qkv_proj_kernel(%arg0: i32, %arg1: i32, %arg2: memref<1x8x32xf32, #tpu.memory_space<vmem>>, %arg3: memref<1x32xf32, #tpu.memory_space<vmem>>, %arg4: memref<1x32xf32, #tpu.memory_space<vmem>>, %arg5: memref<32x96xbf16, #tpu.memory_space<vmem>>, %arg6: memref<1x32xf32, #tpu.memory_space<vmem>>, %arg7: memref<1x32xf32, #tpu.memory_space<vmem>>, %arg8: memref<1x4x8x8xbf16, #tpu.memory_space<vmem>>, %arg9: memref<1x4x8x8xbf16, #tpu.memory_space<vmem>>, %arg10: memref<1x4x8x8xbf16, #tpu.memory_space<vmem>>) attributes {dimension_semantics = [#tpu.dimension_semantics<parallel>, #tpu.dimension_semantics<parallel>], iteration_bounds = array<i64: 2, 1>, scalar_prefetch = 0 : i64, scratch_operands = 0 : i64, tpu.core_type = #tpu.core_type<tc>, window_params = [{transform_indices = @transform_0, window_bounds = array<i64: 1, 8, 32>}, {pipeline_mode = #tpu.pipeline_mode<synchronous>, transform_indices = @transform_1, window_bounds = array<i64: 1, 32>}, {pipeline_mode = #tpu.pipeline_mode<synchronous>, transform_indices = @transform_2, window_bounds = array<i64: 1, 32>}, {pipeline_mode = #tpu.pipeline_mode<synchronous>, transform_indices = @transform_3, window_bounds = array<i64: 32, 96>}, {pipeline_mode = #tpu.pipeline_mode<synchronous>, transform_indices = @transform_4, window_bounds = array<i64: 1, 32>}, {pipeline_mode = #tpu.pipeline_mode<synchronous>, transform_indices = @transform_5, window_bounds = array<i64: 1, 32>}, {transform_indices = @transform_6, window_bounds = array<i64: 1, 4, 8, 8>}, {transform_indices = @transform_7, window_bounds = array<i64: 1, 4, 8, 8>}, {transform_indices = @transform_8, window_bounds = array<i64: 1, 4, 8, 8>}]} {
    %c0 = arith.constant 0 : index
    %c0_0 = arith.constant 0 : index
    %c0_1 = arith.constant 0 : index
    %0 = vector.load %arg2[%c0, %c0_0, %c0_1] : memref<1x8x32xf32, #tpu.memory_space<vmem>>, vector<1x8x32xf32>
    %1 = vector.shape_cast %0 : vector<1x8x32xf32> to vector<8x32xf32>
    %c0_2 = arith.constant 0 : index
    %c0_3 = arith.constant 0 : index
    %2 = vector.load %arg3[%c0_2, %c0_3] : memref<1x32xf32, #tpu.memory_space<vmem>>, vector<1x32xf32>
    %c0_4 = arith.constant 0 : index
    %c0_5 = arith.constant 0 : index
    %3 = vector.load %arg4[%c0_4, %c0_5] : memref<1x32xf32, #tpu.memory_space<vmem>>, vector<1x32xf32>
    %cst = arith.constant dense<0.000000e+00> : vector<8xf32>
    %4 = vector.multi_reduction <add>, %1, %cst [1] : vector<8x32xf32> to vector<8xf32>
    %5 = vector.shape_cast %4 : vector<8xf32> to vector<8x1xf32>
    %cst_6 = arith.constant 3.200000e+01 : f32
    %6 = vector.broadcast %cst_6 : f32 to vector<8x1xf32>
    %7 = arith.divf %5, %6 : vector<8x1xf32>
    %8 = vector.broadcast %7 : vector<8x1xf32> to vector<8x32xf32>
    %9 = arith.subf %1, %8 : vector<8x32xf32>
    %10 = arith.mulf %9, %9 : vector<8x32xf32>
    %cst_7 = arith.constant dense<0.000000e+00> : vector<8xf32>
    %11 = vector.multi_reduction <add>, %10, %cst_7 [1] : vector<8x32xf32> to vector<8xf32>
    %12 = vector.shape_cast %11 : vector<8xf32> to vector<8x1xf32>
    %cst_8 = arith.constant 3.200000e+01 : f32
    %13 = vector.broadcast %cst_8 : f32 to vector<8x1xf32>
    %14 = arith.divf %12, %13 : vector<8x1xf32>
    %15 = vector.broadcast %7 : vector<8x1xf32> to vector<8x32xf32>
    %16 = arith.subf %1, %15 : vector<8x32xf32>
    %cst_9 = arith.constant 9.99999974E-6 : f32
    %17 = vector.broadcast %cst_9 : f32 to vector<8x1xf32>
    %18 = arith.addf %14, %17 : vector<8x1xf32>
    %19 = math.rsqrt %18 : vector<8x1xf32>
    %20 = vector.broadcast %19 : vector<8x1xf32> to vector<8x32xf32>
    %21 = arith.mulf %16, %20 : vector<8x32xf32>
    %22 = vector.broadcast %2 : vector<1x32xf32> to vector<8x32xf32>
    %23 = arith.mulf %21, %22 : vector<8x32xf32>
    %24 = vector.broadcast %3 : vector<1x32xf32> to vector<8x32xf32>
    %25 = arith.addf %23, %24 : vector<8x32xf32>
    %26 = arith.truncf %25 : vector<8x32xf32> to vector<8x32xbf16>
    %c0_10 = arith.constant 0 : index
    %c0_11 = arith.constant 0 : index
    %27 = vector.load %arg5[%c0_10, %c0_11] : memref<32x96xbf16, #tpu.memory_space<vmem>>, vector<32x96xbf16>
    %cst_12 = arith.constant dense<0.000000e+00> : vector<8x96xf32>
    %28 = tpu.matmul %26, %27, %cst_12 {dimension_numbers = #tpu.dot_dimension_numbers<[1], [0], [0], [1], [0, 0, 1, 1], [], []>} : vector<8x32xbf16>, vector<32x96xbf16>, vector<8x96xf32> -> vector<8x96xf32>
    %29 = vector.extract_strided_slice %28 {offsets = [0, 0], sizes = [8, 32], strides = [1, 1]} : vector<8x96xf32> to vector<8x32xf32>
    %c0_13 = arith.constant 0 : index
    %c0_14 = arith.constant 0 : index
    %30 = vector.load %arg6[%c0_13, %c0_14] : memref<1x32xf32, #tpu.memory_space<vmem>>, vector<1x32xf32>
    %cst_15 = arith.constant dense<0.000000e+00> : vector<8xf32>
    %31 = vector.multi_reduction <add>, %29, %cst_15 [1] : vector<8x32xf32> to vector<8xf32>
    %32 = vector.shape_cast %31 : vector<8xf32> to vector<8x1xf32>
    %cst_16 = arith.constant 3.200000e+01 : f32
    %33 = vector.broadcast %cst_16 : f32 to vector<8x1xf32>
    %34 = arith.divf %32, %33 : vector<8x1xf32>
    %35 = vector.broadcast %34 : vector<8x1xf32> to vector<8x32xf32>
    %36 = arith.subf %29, %35 : vector<8x32xf32>
    %37 = arith.mulf %36, %36 : vector<8x32xf32>
    %cst_17 = arith.constant dense<0.000000e+00> : vector<8xf32>
    %38 = vector.multi_reduction <add>, %37, %cst_17 [1] : vector<8x32xf32> to vector<8xf32>
    %39 = vector.shape_cast %38 : vector<8xf32> to vector<8x1xf32>
    %cst_18 = arith.constant 3.200000e+01 : f32
    %40 = vector.broadcast %cst_18 : f32 to vector<8x1xf32>
    %41 = arith.divf %39, %40 : vector<8x1xf32>
    %42 = vector.broadcast %34 : vector<8x1xf32> to vector<8x32xf32>
    %43 = arith.subf %29, %42 : vector<8x32xf32>
    %cst_19 = arith.constant 9.99999974E-6 : f32
    %44 = vector.broadcast %cst_19 : f32 to vector<8x1xf32>
    %45 = arith.addf %41, %44 : vector<8x1xf32>
    %46 = math.rsqrt %45 : vector<8x1xf32>
    %47 = vector.broadcast %46 : vector<8x1xf32> to vector<8x32xf32>
    %48 = arith.mulf %43, %47 : vector<8x32xf32>
    %49 = vector.broadcast %30 : vector<1x32xf32> to vector<8x32xf32>
    %50 = arith.mulf %48, %49 : vector<8x32xf32>
    %cst_20 = arith.constant 0.353553385 : f32
    %51 = vector.broadcast %cst_20 : f32 to vector<8x32xf32>
    %52 = arith.mulf %50, %51 : vector<8x32xf32>
    %53 = vector.extract_strided_slice %28 {offsets = [0, 32], sizes = [8, 32], strides = [1, 1]} : vector<8x96xf32> to vector<8x32xf32>
    %c0_21 = arith.constant 0 : index
    %c0_22 = arith.constant 0 : index
    %54 = vector.load %arg7[%c0_21, %c0_22] : memref<1x32xf32, #tpu.memory_space<vmem>>, vector<1x32xf32>
    %cst_23 = arith.constant dense<0.000000e+00> : vector<8xf32>
    %55 = vector.multi_reduction <add>, %53, %cst_23 [1] : vector<8x32xf32> to vector<8xf32>
    %56 = vector.shape_cast %55 : vector<8xf32> to vector<8x1xf32>
    %cst_24 = arith.constant 3.200000e+01 : f32
    %57 = vector.broadcast %cst_24 : f32 to vector<8x1xf32>
    %58 = arith.divf %56, %57 : vector<8x1xf32>
    %59 = vector.broadcast %58 : vector<8x1xf32> to vector<8x32xf32>
    %60 = arith.subf %53, %59 : vector<8x32xf32>
    %61 = arith.mulf %60, %60 : vector<8x32xf32>
    %cst_25 = arith.constant dense<0.000000e+00> : vector<8xf32>
    %62 = vector.multi_reduction <add>, %61, %cst_25 [1] : vector<8x32xf32> to vector<8xf32>
    %63 = vector.shape_cast %62 : vector<8xf32> to vector<8x1xf32>
    %cst_26 = arith.constant 3.200000e+01 : f32
    %64 = vector.broadcast %cst_26 : f32 to vector<8x1xf32>
    %65 = arith.divf %63, %64 : vector<8x1xf32>
    %66 = vector.broadcast %58 : vector<8x1xf32> to vector<8x32xf32>
    %67 = arith.subf %53, %66 : vector<8x32xf32>
    %cst_27 = arith.constant 9.99999974E-6 : f32
    %68 = vector.broadcast %cst_27 : f32 to vector<8x1xf32>
    %69 = arith.addf %65, %68 : vector<8x1xf32>
    %70 = math.rsqrt %69 : vector<8x1xf32>
    %71 = vector.broadcast %70 : vector<8x1xf32> to vector<8x32xf32>
    %72 = arith.mulf %67, %71 : vector<8x32xf32>
    %73 = vector.broadcast %54 : vector<1x32xf32> to vector<8x32xf32>
    %74 = arith.mulf %72, %73 : vector<8x32xf32>
    %75 = vector.extract_strided_slice %28 {offsets = [0, 64], sizes = [8, 32], strides = [1, 1]} : vector<8x96xf32> to vector<8x32xf32>
    %76 = vector.extract_strided_slice %52 {offsets = [0, 0], sizes = [8, 8], strides = [1, 1]} : vector<8x32xf32> to vector<8x8xf32>
    %77 = arith.truncf %76 : vector<8x8xf32> to vector<8x8xbf16>
    %c0_28 = arith.constant 0 : index
    %c0_29 = arith.constant 0 : index
    %c0_30 = arith.constant 0 : index
    %c0_31 = arith.constant 0 : index
    %78 = vector.load %arg8[%c0_28, %c0_29, %c0_30, %c0_31] : memref<1x4x8x8xbf16, #tpu.memory_space<vmem>>, vector<1x1x8x8xbf16>
    %79 = vector.shape_cast %78 : vector<1x1x8x8xbf16> to vector<8x8xbf16>
    %80 = vector.shape_cast %77 : vector<8x8xbf16> to vector<1x1x8x8xbf16>
    tpu.vector_store %arg8[%c0_28, %c0_29, %c0_30, %c0_31], %80 {strides = array<i32>} : memref<1x4x8x8xbf16, #tpu.memory_space<vmem>>, vector<1x1x8x8xbf16>,
    %81 = vector.extract_strided_slice %74 {offsets = [0, 0], sizes = [8, 8], strides = [1, 1]} : vector<8x32xf32> to vector<8x8xf32>
    %82 = arith.truncf %81 : vector<8x8xf32> to vector<8x8xbf16>
    %c0_32 = arith.constant 0 : index
    %c0_33 = arith.constant 0 : index
    %c0_34 = arith.constant 0 : index
    %c0_35 = arith.constant 0 : index
    %83 = vector.load %arg9[%c0_32, %c0_33, %c0_34, %c0_35] : memref<1x4x8x8xbf16, #tpu.memory_space<vmem>>, vector<1x1x8x8xbf16>
    %84 = vector.shape_cast %83 : vector<1x1x8x8xbf16> to vector<8x8xbf16>
    %85 = vector.shape_cast %82 : vector<8x8xbf16> to vector<1x1x8x8xbf16>
    tpu.vector_store %arg9[%c0_32, %c0_33, %c0_34, %c0_35], %85 {strides = array<i32>} : memref<1x4x8x8xbf16, #tpu.memory_space<vmem>>, vector<1x1x8x8xbf16>,
    %86 = vector.extract_strided_slice %75 {offsets = [0, 0], sizes = [8, 8], strides = [1, 1]} : vector<8x32xf32> to vector<8x8xf32>
    %87 = arith.truncf %86 : vector<8x8xf32> to vector<8x8xbf16>
    %c0_36 = arith.constant 0 : index
    %c0_37 = arith.constant 0 : index
    %c0_38 = arith.constant 0 : index
    %c0_39 = arith.constant 0 : index
    %88 = vector.load %arg10[%c0_36, %c0_37, %c0_38, %c0_39] : memref<1x4x8x8xbf16, #tpu.memory_space<vmem>>, vector<1x1x8x8xbf16>
    %89 = vector.shape_cast %88 : vector<1x1x8x8xbf16> to vector<8x8xbf16>
    %90 = vector.shape_cast %87 : vector<8x8xbf16> to vector<1x1x8x8xbf16>
    tpu.vector_store %arg10[%c0_36, %c0_37, %c0_38, %c0_39], %90 {strides = array<i32>} : memref<1x4x8x8xbf16, #tpu.memory_space<vmem>>, vector<1x1x8x8xbf16>,
    %91 = vector.extract_strided_slice %52 {offsets = [0, 8], sizes = [8, 8], strides = [1, 1]} : vector<8x32xf32> to vector<8x8xf32>
    %92 = arith.truncf %91 : vector<8x8xf32> to vector<8x8xbf16>
    %c0_40 = arith.constant 0 : index
    %c1 = arith.constant 1 : index
    %c0_41 = arith.constant 0 : index
    %c0_42 = arith.constant 0 : index
    %93 = vector.load %arg8[%c0_40, %c1, %c0_41, %c0_42] : memref<1x4x8x8xbf16, #tpu.memory_space<vmem>>, vector<1x1x8x8xbf16>
    %94 = vector.shape_cast %93 : vector<1x1x8x8xbf16> to vector<8x8xbf16>
    %95 = vector.shape_cast %92 : vector<8x8xbf16> to vector<1x1x8x8xbf16>
    tpu.vector_store %arg8[%c0_40, %c1, %c0_41, %c0_42], %95 {strides = array<i32>} : memref<1x4x8x8xbf16, #tpu.memory_space<vmem>>, vector<1x1x8x8xbf16>,
    %96 = vector.extract_strided_slice %74 {offsets = [0, 8], sizes = [8, 8], strides = [1, 1]} : vector<8x32xf32> to vector<8x8xf32>
    %97 = arith.truncf %96 : vector<8x8xf32> to vector<8x8xbf16>
    %c0_43 = arith.constant 0 : index
    %c1_44 = arith.constant 1 : index
    %c0_45 = arith.constant 0 : index
    %c0_46 = arith.constant 0 : index
    %98 = vector.load %arg9[%c0_43, %c1_44, %c0_45, %c0_46] : memref<1x4x8x8xbf16, #tpu.memory_space<vmem>>, vector<1x1x8x8xbf16>
    %99 = vector.shape_cast %98 : vector<1x1x8x8xbf16> to vector<8x8xbf16>
    %100 = vector.shape_cast %97 : vector<8x8xbf16> to vector<1x1x8x8xbf16>
    tpu.vector_store %arg9[%c0_43, %c1_44, %c0_45, %c0_46], %100 {strides = array<i32>} : memref<1x4x8x8xbf16, #tpu.memory_space<vmem>>, vector<1x1x8x8xbf16>,
    %101 = vector.extract_strided_slice %75 {offsets = [0, 8], sizes = [8, 8], strides = [1, 1]} : vector<8x32xf32> to vector<8x8xf32>
    %102 = arith.truncf %101 : vector<8x8xf32> to vector<8x8xbf16>
    %c0_47 = arith.constant 0 : index
    %c1_48 = arith.constant 1 : index
    %c0_49 = arith.constant 0 : index
    %c0_50 = arith.constant 0 : index
    %103 = vector.load %arg10[%c0_47, %c1_48, %c0_49, %c0_50] : memref<1x4x8x8xbf16, #tpu.memory_space<vmem>>, vector<1x1x8x8xbf16>
    %104 = vector.shape_cast %103 : vector<1x1x8x8xbf16> to vector<8x8xbf16>
    %105 = vector.shape_cast %102 : vector<8x8xbf16> to vector<1x1x8x8xbf16>
    tpu.vector_store %arg10[%c0_47, %c1_48, %c0_49, %c0_50], %105 {strides = array<i32>} : memref<1x4x8x8xbf16, #tpu.memory_space<vmem>>, vector<1x1x8x8xbf16>,
    %106 = vector.extract_strided_slice %52 {offsets = [0, 16], sizes = [8, 8], strides = [1, 1]} : vector<8x32xf32> to vector<8x8xf32>
    %107 = arith.truncf %106 : vector<8x8xf32> to vector<8x8xbf16>
    %c0_51 = arith.constant 0 : index
    %c2 = arith.constant 2 : index
    %c0_52 = arith.constant 0 : index
    %c0_53 = arith.constant 0 : index
    %108 = vector.load %arg8[%c0_51, %c2, %c0_52, %c0_53] : memref<1x4x8x8xbf16, #tpu.memory_space<vmem>>, vector<1x1x8x8xbf16>
    %109 = vector.shape_cast %108 : vector<1x1x8x8xbf16> to vector<8x8xbf16>
    %110 = vector.shape_cast %107 : vector<8x8xbf16> to vector<1x1x8x8xbf16>
    tpu.vector_store %arg8[%c0_51, %c2, %c0_52, %c0_53], %110 {strides = array<i32>} : memref<1x4x8x8xbf16, #tpu.memory_space<vmem>>, vector<1x1x8x8xbf16>,
    %111 = vector.extract_strided_slice %74 {offsets = [0, 16], sizes = [8, 8], strides = [1, 1]} : vector<8x32xf32> to vector<8x8xf32>
    %112 = arith.truncf %111 : vector<8x8xf32> to vector<8x8xbf16>
    %c0_54 = arith.constant 0 : index
    %c2_55 = arith.constant 2 : index
    %c0_56 = arith.constant 0 : index
    %c0_57 = arith.constant 0 : index
    %113 = vector.load %arg9[%c0_54, %c2_55, %c0_56, %c0_57] : memref<1x4x8x8xbf16, #tpu.memory_space<vmem>>, vector<1x1x8x8xbf16>
    %114 = vector.shape_cast %113 : vector<1x1x8x8xbf16> to vector<8x8xbf16>
    %115 = vector.shape_cast %112 : vector<8x8xbf16> to vector<1x1x8x8xbf16>
    tpu.vector_store %arg9[%c0_54, %c2_55, %c0_56, %c0_57], %115 {strides = array<i32>} : memref<1x4x8x8xbf16, #tpu.memory_space<vmem>>, vector<1x1x8x8xbf16>,
    %116 = vector.extract_strided_slice %75 {offsets = [0, 16], sizes = [8, 8], strides = [1, 1]} : vector<8x32xf32> to vector<8x8xf32>
    %117 = arith.truncf %116 : vector<8x8xf32> to vector<8x8xbf16>
    %c0_58 = arith.constant 0 : index
    %c2_59 = arith.constant 2 : index
    %c0_60 = arith.constant 0 : index
    %c0_61 = arith.constant 0 : index
    %118 = vector.load %arg10[%c0_58, %c2_59, %c0_60, %c0_61] : memref<1x4x8x8xbf16, #tpu.memory_space<vmem>>, vector<1x1x8x8xbf16>
    %119 = vector.shape_cast %118 : vector<1x1x8x8xbf16> to vector<8x8xbf16>
    %120 = vector.shape_cast %117 : vector<8x8xbf16> to vector<1x1x8x8xbf16>
    tpu.vector_store %arg10[%c0_58, %c2_59, %c0_60, %c0_61], %120 {strides = array<i32>} : memref<1x4x8x8xbf16, #tpu.memory_space<vmem>>, vector<1x1x8x8xbf16>,
    %121 = vector.extract_strided_slice %52 {offsets = [0, 24], sizes = [8, 8], strides = [1, 1]} : vector<8x32xf32> to vector<8x8xf32>
    %122 = arith.truncf %121 : vector<8x8xf32> to vector<8x8xbf16>
    %c0_62 = arith.constant 0 : index
    %c3 = arith.constant 3 : index
    %c0_63 = arith.constant 0 : index
    %c0_64 = arith.constant 0 : index
    %123 = vector.load %arg8[%c0_62, %c3, %c0_63, %c0_64] : memref<1x4x8x8xbf16, #tpu.memory_space<vmem>>, vector<1x1x8x8xbf16>
    %124 = vector.shape_cast %123 : vector<1x1x8x8xbf16> to vector<8x8xbf16>
    %125 = vector.shape_cast %122 : vector<8x8xbf16> to vector<1x1x8x8xbf16>
    tpu.vector_store %arg8[%c0_62, %c3, %c0_63, %c0_64], %125 {strides = array<i32>} : memref<1x4x8x8xbf16, #tpu.memory_space<vmem>>, vector<1x1x8x8xbf16>,
    %126 = vector.extract_strided_slice %74 {offsets = [0, 24], sizes = [8, 8], strides = [1, 1]} : vector<8x32xf32> to vector<8x8xf32>
    %127 = arith.truncf %126 : vector<8x8xf32> to vector<8x8xbf16>
    %c0_65 = arith.constant 0 : index
    %c3_66 = arith.constant 3 : index
    %c0_67 = arith.constant 0 : index
    %c0_68 = arith.constant 0 : index
    %128 = vector.load %arg9[%c0_65, %c3_66, %c0_67, %c0_68] : memref<1x4x8x8xbf16, #tpu.memory_space<vmem>>, vector<1x1x8x8xbf16>
    %129 = vector.shape_cast %128 : vector<1x1x8x8xbf16> to vector<8x8xbf16>
    %130 = vector.shape_cast %127 : vector<8x8xbf16> to vector<1x1x8x8xbf16>
    tpu.vector_store %arg9[%c0_65, %c3_66, %c0_67, %c0_68], %130 {strides = array<i32>} : memref<1x4x8x8xbf16, #tpu.memory_space<vmem>>, vector<1x1x8x8xbf16>,
    %131 = vector.extract_strided_slice %75 {offsets = [0, 24], sizes = [8, 8], strides = [1, 1]} : vector<8x32xf32> to vector<8x8xf32>
    %132 = arith.truncf %131 : vector<8x8xf32> to vector<8x8xbf16>
    %c0_69 = arith.constant 0 : index
    %c3_70 = arith.constant 3 : index
    %c0_71 = arith.constant 0 : index
    %c0_72 = arith.constant 0 : index
    %133 = vector.load %arg10[%c0_69, %c3_70, %c0_71, %c0_72] : memref<1x4x8x8xbf16, #tpu.memory_space<vmem>>, vector<1x1x8x8xbf16>
    %134 = vector.shape_cast %133 : vector<1x1x8x8xbf16> to vector<8x8xbf16>
    %135 = vector.shape_cast %132 : vector<8x8xbf16> to vector<1x1x8x8xbf16>
    tpu.vector_store %arg10[%c0_69, %c3_70, %c0_71, %c0_72], %135 {strides = array<i32>} : memref<1x4x8x8xbf16, #tpu.memory_space<vmem>>, vector<1x1x8x8xbf16>,
    return
  }
  func.func @transform_0(%arg0: i32, %arg1: i32) -> (i32, i32, i32) {
    %c0_i32 = arith.constant 0 : i32
    %c0_i32_0 = arith.constant 0 : i32
    return %arg0, %arg1, %c0_i32 : i32, i32, i32
  }
  func.func @transform_1(%arg0: i32, %arg1: i32) -> (i32, i32) {
    %c0_i32 = arith.constant 0 : i32
    %c0_i32_0 = arith.constant 0 : i32
    %c0_i32_1 = arith.constant 0 : i32
    return %c0_i32, %c0_i32_0 : i32, i32
  }
  func.func @transform_2(%arg0: i32, %arg1: i32) -> (i32, i32) {
    %c0_i32 = arith.constant 0 : i32
    %c0_i32_0 = arith.constant 0 : i32
    %c0_i32_1 = arith.constant 0 : i32
    return %c0_i32, %c0_i32_0 : i32, i32
  }
  func.func @transform_3(%arg0: i32, %arg1: i32) -> (i32, i32) {
    %c0_i32 = arith.constant 0 : i32
    %c0_i32_0 = arith.constant 0 : i32
    %c0_i32_1 = arith.constant 0 : i32
    return %c0_i32, %c0_i32_0 : i32, i32
  }
  func.func @transform_4(%arg0: i32, %arg1: i32) -> (i32, i32) {
    %c0_i32 = arith.constant 0 : i32
    %c0_i32_0 = arith.constant 0 : i32
    %c0_i32_1 = arith.constant 0 : i32
    return %c0_i32, %c0_i32_0 : i32, i32
  }
  func.func @transform_5(%arg0: i32, %arg1: i32) -> (i32, i32) {
    %c0_i32 = arith.constant 0 : i32
    %c0_i32_0 = arith.constant 0 : i32
    %c0_i32_1 = arith.constant 0 : i32
    return %c0_i32, %c0_i32_0 : i32, i32
  }
  func.func @transform_6(%arg0: i32, %arg1: i32) -> (i32, i32, i32, i32) {
    %c0_i32 = arith.constant 0 : i32
    %c0_i32_0 = arith.constant 0 : i32
    %c0_i32_1 = arith.constant 0 : i32
    return %arg0, %c0_i32, %arg1, %c0_i32_0 : i32, i32, i32, i32
  }
  func.func @transform_7(%arg0: i32, %arg1: i32) -> (i32, i32, i32, i32) {
    %c0_i32 = arith.constant 0 : i32
    %c0_i32_0 = arith.constant 0 : i32
    %c0_i32_1 = arith.constant 0 : i32
    return %arg0, %c0_i32, %arg1, %c0_i32_0 : i32, i32, i32, i32
  }
  func.func @transform_8(%arg0: i32, %arg1: i32) -> (i32, i32, i32, i32) {
    %c0_i32 = arith.constant 0 : i32
    %c0_i32_0 = arith.constant 0 : i32
    %c0_i32_1 = arith.constant 0 : i32
    return %arg0, %c0_i32, %arg1, %c0_i32_0 : i32, i32, i32, i32
  }
}

</mosaic_0001>

<llo_original>
// kernel: tpu_custom_call.1
$region0: #{tpu_custom_call.1}
  #allocation0 [shape = 'u32[]', space=smem, size = 0x4, offset = 0x4, fixed_abs, tag = 'smem constant byte address 0x4 - core index']
  #allocation1 [shape = 'u32[144,128]{1,0:T(1,128)}', space=vmem, size = 0x12000, scoped, tag = 'internal scratch']
  %s0 = inlined_call_operand.hbm [shape: f32[2,8,32], index: 0, kind: input, shape index: {}]
  %s1 = inlined_call_operand.vmem [shape: f32[1,32], index: 1, kind: input, shape index: {}]
  %s2 = inlined_call_operand.vmem [shape: f32[1,32], index: 2, kind: input, shape index: {}]
  %s3 = inlined_call_operand.hbm [shape: bf16[32,96], index: 3, kind: input, shape index: {}]
  %s4 = inlined_call_operand.vmem [shape: f32[1,32], index: 4, kind: input, shape index: {}]
  %s5 = inlined_call_operand.vmem [shape: f32[1,32], index: 5, kind: input, shape index: {}]
  %s6 = inlined_call_operand.hbm [shape: bf16[2,4,8,8], index: 6, kind: output, shape index: {0}]
  %s7 = inlined_call_operand.hbm [shape: bf16[2,4,8,8], index: 7, kind: output, shape index: {1}]
  %s8 = inlined_call_operand.hbm [shape: bf16[2,4,8,8], index: 8, kind: output, shape index: {2}]
  %9 = xla_tuple %s6, %s7, %s8
  %s10 = sld [smem:[#allocation0]]
  $region81: #{tpu_custom_call.1} parent=0
    _
  %s12 = ssub.s32 1, %s10
  %s13 = scalar_select 0, %s12, %s10
  $region1: #{tpu_custom_call.1} parent=0
    #allocation2 [shape = 'u8[8192]{0}', space=vmem, size = 0x2000, scoped, tag = 'input window, operand 0']
    #allocation3 [shape = 's32[2]{0}', space=sflag, size = 0x8, scoped, tag = 'scoped memory for tpu_custom_call.1']
    #allocation4 [shape = 's32[2]{0}', space=sflag, size = 0x8, scoped, tag = 'scoped memory for tpu_custom_call.1']
    #allocation5 [shape = 'u8[8192]{0}', space=vmem, size = 0x2000, scoped, tag = 'input window, operand 3, single buffered']
    #allocation6 [shape = 's32[1]{0}', space=sflag, size = 0x4, scoped, tag = 'scoped memory for tpu_custom_call.1']
    #allocation7 [shape = 'u8[16384]{0}', space=vmem, size = 0x4000, scoped, tag = 'output window, operand 0']
    #allocation8 [shape = 'u8[16384]{0}', space=vmem, size = 0x4000, scoped, tag = 'output window, operand 1']
    #allocation9 [shape = 's32[2]{0}', space=sflag, size = 0x8, scoped, tag = 'scoped memory for tpu_custom_call.1']
    #allocation10 [shape = 'u8[16384]{0}', space=vmem, size = 0x4000, scoped, tag = 'output window, operand 2']
    %14 = vsyncpa [#allocation3], 0
    %s15 = scalar_lea.sflag [#allocation3], 1
    %16 = vsyncpa %s15, 0
    %17 = vsyncpa [#allocation6], 0
    %18 = vsyncpa [#allocation4], 0
    %s19 = scalar_lea.sflag [#allocation4], 1
    %20 = vsyncpa %s19, 0
    %21 = vsyncpa [#allocation9], 0
    %s22 = scalar_lea.sflag [#allocation9], 1
    %23 = vsyncpa %s22, 0
    loop: start=0, step=1, limit=4
    $region2: #{tpu_custom_call.1} parent=1 // loop_pre_header
      _
    $region3: #{tpu_custom_call.1} parent=1 // loop_header
      %s25 = sphi 0, %s29
      %p26 = scmp.ge.s32.totalorder %s25, 4
      %s32 = sphi 0, %s44
      %s33 = sphi 0, %s40
      %s34 = sphi 0, %s32
      %s35 = sphi 0, %s33
      %s36 = sphi 0, %s34
      %s37 = sphi 0, %s35
      %s49 = sphi 0, %s51
      %s52 = sphi 0, %s49
      %s53 = sphi 0, %s52
      %s69 = sphi 0, %s53
      %s73 = sphi 0, %s73
      %s75 = sphi 0, %s73
      %s76 = sphi 0, %s75
      %s90 = sphi 0, %s76
      %s94 = sphi 0, %s94
      %s96 = sphi 0, %s94
      %s97 = sphi 0, %s96
      %s111 = sphi 0, %s97
      %s115 = sphi 0, %s115
      %s117 = sphi 0, %s115
      %s118 = sphi 0, %s117
      %s132 = sphi 0, %s118
      %s136 = sphi 0, %s136
      %s138 = sphi 0, %s136
      %s139 = sphi 0, %s138
      %s153 = sphi 0, %s139
      %s157 = sphi 0, %s157
      %s159 = sphi 0, %s157
      %s160 = sphi 0, %s159
      %s174 = sphi 0, %s160
      %s182 = sphi 0, %s184
      %s185 = sphi 0, %s182
      %s186 = sphi 0, %s185
      %s202 = sphi 0, %s186
      %s210 = sphi 0, %s212
      %s213 = sphi 0, %s210
      %s214 = sphi 0, %s213
      %s230 = sphi 0, %s214
      %s238 = sphi 0, %s240
      %s241 = sphi 0, %s238
      %s242 = sphi 0, %s241
      %s258 = sphi 0, %s242
    $region4: #{tpu_custom_call.1} parent=1 // loop_header_branch
      %28 = sbr.rel (%p26) target = $region8
    $region5: #{tpu_custom_call.1} parent=1 // loop_body
      %s30 = ssub.s32 %s25, 1
      %s31 = ssub.s32 %s25, 2
      %s38 = sadd.s32 1, %s33
      %p39 = scmp.ge.s32.totalorder %s38, 1
      %s40 = scalar_select %p39, 0, %s38
      %s41 = sadd.s32 1, %s32
      %s42 = scalar_select %p39, %s41, %s32
      %p43 = scmp.ge.s32.totalorder %s42, 2
      %s44 = scalar_select %p43, 0, %s42
      %s45 = ssub.s32 %s32, %s44
      %s46 = ssub.s32 %s33, %s40
      %s47 = sor.u32 %s45, %s46
      %p48 = scmp.eq.s32.totalorder %s47, 0
      %s50 = sadd.s32 %s49, 1
      %s51 = scalar_select %p48, %s49, %s50
      %p54 = pneg %p48
      %p55 = scmp.eq.s32.totalorder %s25, 1
      %p56 = por %p54, %p55
      %p57 = scmp.ne.s32.totalorder %s49, %s52
      %p58 = scmp.eq.s32.totalorder %s25, 0
      %p59 = por %p57, %p58
      %p60 = scmp.ne.s32.totalorder %s49, %s52
      %p61 = scmp.eq.s32.totalorder %s30, 1
      %p62 = por %p60, %p61
      %p63 = scmp.ne.s32.totalorder %s52, %s53
      %p64 = scmp.eq.s32.totalorder %s30, 0
      %p65 = por %p63, %p64
      %p66 = scmp.ne.s32.totalorder %s52, %s53
      %p67 = scmp.eq.s32.totalorder %s31, 1
      %p68 = por %p66, %p67
      %p70 = scmp.ne.s32.totalorder %s53, %s69
      %p71 = scmp.eq.s32.totalorder %s31, 0
      %p72 = por %p70, %p71
      %s74 = sadd.s32 %s73, 1
      %p77 = scmp.eq.s32.totalorder %s25, 1
      %p78 = scmp.ne.s32.totalorder %s73, %s75
      %p79 = scmp.eq.s32.totalorder %s25, 0
      %p80 = por %p78, %p79
      %p81 = scmp.ne.s32.totalorder %s73, %s75
      %p82 = scmp.eq.s32.totalorder %s30, 1
      %p83 = por %p81, %p82
      %p84 = scmp.ne.s32.totalorder %s75, %s76
      %p85 = scmp.eq.s32.totalorder %s30, 0
      %p86 = por %p84, %p85
      %p87 = scmp.ne.s32.totalorder %s75, %s76
      %p88 = scmp.eq.s32.totalorder %s31, 1
      %p89 = por %p87, %p88
      %p91 = scmp.ne.s32.totalorder %s76, %s90
      %p92 = scmp.eq.s32.totalorder %s31, 0
      %p93 = por %p91, %p92
      %s95 = sadd.s32 %s94, 1
      %p98 = scmp.eq.s32.totalorder %s25, 1
      %p99 = scmp.ne.s32.totalorder %s94, %s96
      %p100 = scmp.eq.s32.totalorder %s25, 0
      %p101 = por %p99, %p100
      %p102 = scmp.ne.s32.totalorder %s94, %s96
      %p103 = scmp.eq.s32.totalorder %s30, 1
      %p104 = por %p102, %p103
      %p105 = scmp.ne.s32.totalorder %s96, %s97
      %p106 = scmp.eq.s32.totalorder %s30, 0
      %p107 = por %p105, %p106
      %p108 = scmp.ne.s32.totalorder %s96, %s97
      %p109 = scmp.eq.s32.totalorder %s31, 1
      %p110 = por %p108, %p109
      %p112 = scmp.ne.s32.totalorder %s97, %s111
      %p113 = scmp.eq.s32.totalorder %s31, 0
      %p114 = por %p112, %p113
      %s116 = sadd.s32 %s115, 1
      %p119 = scmp.eq.s32.totalorder %s25, 1
      %p120 = scmp.ne.s32.totalorder %s115, %s117
      %p121 = scmp.eq.s32.totalorder %s25, 0
      %p122 = por %p120, %p121
      %p123 = scmp.ne.s32.totalorder %s115, %s117
      %p124 = scmp.eq.s32.totalorder %s30, 1
      %p125 = por %p123, %p124
      %p126 = scmp.ne.s32.totalorder %s117, %s118
      %p127 = scmp.eq.s32.totalorder %s30, 0
      %p128 = por %p126, %p127
      %p129 = scmp.ne.s32.totalorder %s117, %s118
      %p130 = scmp.eq.s32.totalorder %s31, 1
      %p131 = por %p129, %p130
      %p133 = scmp.ne.s32.totalorder %s118, %s132
      %p134 = scmp.eq.s32.totalorder %s31, 0
      %p135 = por %p133, %p134
      %s137 = sadd.s32 %s136, 1
      %p140 = scmp.eq.s32.totalorder %s25, 1
      %p141 = scmp.ne.s32.totalorder %s136, %s138
      %p142 = scmp.eq.s32.totalorder %s25, 0
      %p143 = por %p141, %p142
      %p144 = scmp.ne.s32.totalorder %s136, %s138
      %p145 = scmp.eq.s32.totalorder %s30, 1
      %p146 = por %p144, %p145
      %p147 = scmp.ne.s32.totalorder %s138, %s139
      %p148 = scmp.eq.s32.totalorder %s30, 0
      %p149 = por %p147, %p148
      %p150 = scmp.ne.s32.totalorder %s138, %s139
      %p151 = scmp.eq.s32.totalorder %s31, 1
      %p152 = por %p150, %p151
      %p154 = scmp.ne.s32.totalorder %s139, %s153
      %p155 = scmp.eq.s32.totalorder %s31, 0
      %p156 = por %p154, %p155
      %s158 = sadd.s32 %s157, 1
      %p161 = scmp.eq.s32.totalorder %s25, 1
      %p162 = scmp.ne.s32.totalorder %s157, %s159
      %p163 = scmp.eq.s32.totalorder %s25, 0
      %p164 = por %p162, %p163
      %p165 = scmp.ne.s32.totalorder %s157, %s159
      %p166 = scmp.eq.s32.totalorder %s30, 1
      %p167 = por %p165, %p166
      %p168 = scmp.ne.s32.totalorder %s159, %s160
      %p169 = scmp.eq.s32.totalorder %s30, 0
      %p170 = por %p168, %p169
      %p171 = scmp.ne.s32.totalorder %s159, %s160
      %p172 = scmp.eq.s32.totalorder %s31, 1
      %p173 = por %p171, %p172
      %p175 = scmp.ne.s32.totalorder %s160, %s174
      %p176 = scmp.eq.s32.totalorder %s31, 0
      %p177 = por %p175, %p176
      %s178 = ssub.s32 %s32, %s44
      %s179 = ssub.s32 %s33, %s40
      %s180 = sor.u32 %s178, %s179
      %p181 = scmp.eq.s32.totalorder %s180, 0
      %s183 = sadd.s32 %s182, 1
      %s184 = scalar_select %p181, %s182, %s183
      %p187 = pneg %p181
      %p188 = scmp.eq.s32.totalorder %s25, 1
      %p189 = por %p187, %p188
      %p190 = scmp.ne.s32.totalorder %s182, %s185
      %p191 = scmp.eq.s32.totalorder %s25, 0
      %p192 = por %p190, %p191
      %p193 = scmp.ne.s32.totalorder %s182, %s185
      %p194 = scmp.eq.s32.totalorder %s30, 1
      %p195 = por %p193, %p194
      %p196 = scmp.ne.s32.totalorder %s185, %s186
      %p197 = scmp.eq.s32.totalorder %s30, 0
      %p198 = por %p196, %p197
      %p199 = scmp.ne.s32.totalorder %s185, %s186
      %p200 = scmp.eq.s32.totalorder %s31, 1
      %p201 = por %p199, %p200
      %p203 = scmp.ne.s32.totalorder %s186, %s202
      %p204 = scmp.eq.s32.totalorder %s31, 0
      %p205 = por %p203, %p204
      %s206 = ssub.s32 %s32, %s44
      %s207 = ssub.s32 %s33, %s40
      %s208 = sor.u32 %s206, %s207
      %p209 = scmp.eq.s32.totalorder %s208, 0
      %s211 = sadd.s32 %s210, 1
      %s212 = scalar_select %p209, %s210, %s211
      %p215 = pneg %p209
      %p216 = scmp.eq.s32.totalorder %s25, 1
      %p217 = por %p215, %p216
      %p218 = scmp.ne.s32.totalorder %s210, %s213
      %p219 = scmp.eq.s32.totalorder %s25, 0
      %p220 = por %p218, %p219
      %p221 = scmp.ne.s32.totalorder %s210, %s213
      %p222 = scmp.eq.s32.totalorder %s30, 1
      %p223 = por %p221, %p222
      %p224 = scmp.ne.s32.totalorder %s213, %s214
      %p225 = scmp.eq.s32.totalorder %s30, 0
      %p226 = por %p224, %p225
      %p227 = scmp.ne.s32.totalorder %s213, %s214
      %p228 = scmp.eq.s32.totalorder %s31, 1
      %p229 = por %p227, %p228
      %p231 = scmp.ne.s32.totalorder %s214, %s230
      %p232 = scmp.eq.s32.totalorder %s31, 0
      %p233 = por %p231, %p232
      %s234 = ssub.s32 %s32, %s44
      %s235 = ssub.s32 %s33, %s40
      %s236 = sor.u32 %s234, %s235
      %p237 = scmp.eq.s32.totalorder %s236, 0
      %s239 = sadd.s32 %s238, 1
      %s240 = scalar_select %p237, %s238, %s239
      %p243 = pneg %p237
      %p244 = scmp.eq.s32.totalorder %s25, 1
      %p245 = por %p243, %p244
      %p246 = scmp.ne.s32.totalorder %s238, %s241
      %p247 = scmp.eq.s32.totalorder %s25, 0
      %p248 = por %p246, %p247
      %p249 = scmp.ne.s32.totalorder %s238, %s241
      %p250 = scmp.eq.s32.totalorder %s30, 1
      %p251 = por %p249, %p250
      %p252 = scmp.ne.s32.totalorder %s241, %s242
      %p253 = scmp.eq.s32.totalorder %s30, 0
      %p254 = por %p252, %p253
      %p255 = scmp.ne.s32.totalorder %s241, %s242
      %p256 = scmp.eq.s32.totalorder %s31, 1
      %p257 = por %p255, %p256
      %p259 = scmp.ne.s32.totalorder %s242, %s258
      %p260 = scmp.eq.s32.totalorder %s31, 0
      %p261 = por %p259, %p260
      %p262 = scmp.le.s32.totalorder 1, %s25
      %p263 = scmp.lt.s32.totalorder %s25, 3
      %p264 = pnand %p262, %p263
      %p265 = pneg %p264
      // Predicated region
      $region9: #{tpu_custom_call.1} parent=5 // pred_check
        _
      $region10: #{tpu_custom_call.1} parent=5 // pred_check_branch
        %267 = sbr.rel (%p264) target = $region12
      $region11: #{tpu_custom_call.1} parent=5 // pred_region
        %s268 = ssub.s32 %s25, 1
        // Predicated region
        $region13: #{tpu_custom_call.1} parent=11 // pred_check
          %p269 = pneg %p86
        $region14: #{tpu_custom_call.1} parent=11 // pred_check_branch
          %271 = sbr.rel (%p269) target = $region16
        $region15: #{tpu_custom_call.1} parent=11 // pred_region
          _
        $region16: #{tpu_custom_call.1} parent=11 // pred_fallthru
          _
        // Predicated region
        $region17: #{tpu_custom_call.1} parent=11 // pred_check
          %p272 = pneg %p107
        $region18: #{tpu_custom_call.1} parent=11 // pred_check_branch
          %274 = sbr.rel (%p272) target = $region20
        $region19: #{tpu_custom_call.1} parent=11 // pred_region
          _
        $region20: #{tpu_custom_call.1} parent=11 // pred_fallthru
          _
        // Predicated region
        $region21: #{tpu_custom_call.1} parent=11 // pred_check
          %p275 = pneg %p128
        $region22: #{tpu_custom_call.1} parent=11 // pred_check_branch
          %277 = sbr.rel (%p275) target = $region24
        $region23: #{tpu_custom_call.1} parent=11 // pred_region
          %s279 = ssub.s32 256, 256
          %280 = vsyncadd [#allocation6], %s279
          %s281 = sshll.u32 [#allocation5], 4
          %s282 = int_to_ptr.vmem [resolvable:$true] %s281
          %287 = dma.hbm_to_vmem [thread:$0]  %s3, 256, %s282, [#allocation6], 64, 64, 4
        $region24: #{tpu_custom_call.1} parent=11 // pred_fallthru
          _
        // Predicated region
        $region25: #{tpu_custom_call.1} parent=11 // pred_check
          %p288 = pneg %p149
        $region26: #{tpu_custom_call.1} parent=11 // pred_check_branch
          %290 = sbr.rel (%p288) target = $region28
        $region27: #{tpu_custom_call.1} parent=11 // pred_region
          _
        $region28: #{tpu_custom_call.1} parent=11 // pred_fallthru
          _
        // Predicated region
        $region29: #{tpu_custom_call.1} parent=11 // pred_check
          %p291 = pneg %p170
        $region30: #{tpu_custom_call.1} parent=11 // pred_check_branch
          %293 = sbr.rel (%p291) target = $region32
        $region31: #{tpu_custom_call.1} parent=11 // pred_region
          _
        $region32: #{tpu_custom_call.1} parent=11 // pred_fallthru
          _
      $region12: #{tpu_custom_call.1} parent=5 // pred_fallthru
        _
      %p294 = scmp.lt.s32.totalorder %s25, 2
      // Predicated region
      $region33: #{tpu_custom_call.1} parent=5 // pred_check
        %p295 = pneg %p294
      $region34: #{tpu_custom_call.1} parent=5 // pred_check_branch
        %297 = sbr.rel (%p295) target = $region36
      $region35: #{tpu_custom_call.1} parent=5 // pred_region
        // Predicated region
        $region37: #{tpu_custom_call.1} parent=35 // pred_check
          %p298 = pneg %p59
        $region38: #{tpu_custom_call.1} parent=35 // pred_check_branch
          %300 = sbr.rel (%p298) target = $region40
        $region39: #{tpu_custom_call.1} parent=35 // pred_region
          %s301 = sand.u32 %s49, 1
          %s302 = scalar_lea.sflag [#allocation3], %s301
          %s303 = sand.u32 %s49, 1
          %s304 = smul.addr %s303, 8
          %s305 = scalar_lea.vmem [#allocation2], %s304
          %s307 = ssub.s32 128, 128
          %308 = vsyncadd %s302, %s307
          %s309 = sadd.s32 %s33, %s32
          %s310 = smul.addr %s309, 128
          %s311 = scalar_lea.hbm %s0, %s310
          %s313 = sshll.u32 %s305, 4
          %s314 = int_to_ptr.vmem [resolvable:$true] %s313
          %316 = dma.hbm_to_vmem [thread:$0]  %s311, 128, %s314, %s302
        $region40: #{tpu_custom_call.1} parent=35 // pred_fallthru
          _
      $region36: #{tpu_custom_call.1} parent=5 // pred_fallthru
        _
      %p317 = scmp.le.s32.totalorder 1, %s25
      %p318 = scmp.lt.s32.totalorder %s25, 3
      %p319 = pnand %p317, %p318
      %p320 = pneg %p319
      // Predicated region
      $region41: #{tpu_custom_call.1} parent=5 // pred_check
        _
      $region42: #{tpu_custom_call.1} parent=5 // pred_check_branch
        %322 = sbr.rel (%p319) target = $region44
      $region43: #{tpu_custom_call.1} parent=5 // pred_region
        %s323 = ssub.s32 %s25, 1
        %s324 = sand.u32 %s52, 1
        %s325 = scalar_lea.sflag [#allocation3], %s324
        %s326 = sand.u32 %s52, 1
        %s327 = smul.addr %s326, 8
        %s328 = scalar_lea.vmem [#allocation2], %s327
        // Predicated region
        $region45: #{tpu_custom_call.1} parent=43 // pred_check
          %p329 = pneg %p65
        $region46: #{tpu_custom_call.1} parent=43 // pred_check_branch
          %331 = sbr.rel (%p329) target = $region48
        $region47: #{tpu_custom_call.1} parent=43 // pred_region
          %332 = dma.done %s325, 128
        $region48: #{tpu_custom_call.1} parent=43 // pred_fallthru
          _
        // Predicated region
        $region49: #{tpu_custom_call.1} parent=43 // pred_check
          %p333 = pneg %p128
        $region50: #{tpu_custom_call.1} parent=43 // pred_check_branch
          %335 = sbr.rel (%p333) target = $region52
        $region51: #{tpu_custom_call.1} parent=43 // pred_region
          %336 = dma.done [#allocation6], 256
        $region52: #{tpu_custom_call.1} parent=43 // pred_fallthru
          _
        %s337 = sand.u32 %s52, 1
        %s338 = scalar_lea.sflag [#allocation3], %s337
        %s339 = sand.u32 %s52, 1
        %s340 = smul.addr %s339, 8
        %s341 = scalar_lea.vmem [#allocation2], %s340
        %p342 = pneg %p65
        %p343 = pneg %p62
        %p344 = pneg %p86
        %p345 = pneg %p83
        %p346 = pneg %p107
        %p347 = pneg %p104
        %p348 = pneg %p128
        %p349 = pneg %p125
        %p350 = pneg %p149
        %p351 = pneg %p146
        %p352 = pneg %p170
        %p353 = pneg %p167
        %p354 = pneg %p198
        %p355 = pneg %p195
        %s356 = sand.u32 %s185, 1
        %s357 = scalar_lea.sflag [#allocation4], %s356
        %s358 = sand.u32 %s185, 1
        %s359 = smul.addr %s358, 16
        %s360 = scalar_lea.vmem [#allocation7], %s359
        %p361 = pneg %p226
        %p362 = pneg %p223
        %s363 = sand.u32 %s30, 1
        %s364 = scalar_lea.sflag [#allocation9], %s363
        %s365 = sand.u32 %s213, 1
        %s366 = smul.addr %s365, 16
        %s367 = scalar_lea.vmem [#allocation8], %s366
        %p368 = pneg %p254
        %p369 = pneg %p251
        %s370 = sand.u32 %s30, 1
        %s371 = scalar_lea.sflag [#allocation9], %s370
        %s372 = sand.u32 %s241, 1
        %s373 = smul.addr %s372, 16
        %s374 = scalar_lea.vmem [#allocation10], %s373
        %v376 = vld [vmem:[%s328] sm:$0xff]
        %v377 = vld [vmem:[%s1] sm:$0x1]
        %v378 = vld [vmem:[%s2] sm:$0x1]
        %vm379 = vcmask 261120
        %v380 = vsel %vm379, %v376, 0.0
        %381 = vadd.xlane.f32.xlu0 %v380
        %v382 = vpop.xlane.xlu0 %381
        %v383 = vrcp.pop 32.0
        %v384 = vmul.f32 %v382, %v383
        %v385 = vsub.f32 %v376, %v384
        %v386 = vmul.f32 %v385, %v385
        %v387 = vsel %vm379, %v386, 0.0
        %388 = vadd.xlane.f32.xlu0 %v387
        %v389 = vpop.xlane.xlu0 %388
        %v390 = vmul.f32 %v389, %v383
        %v391 = vadd.f32 %v390, 1e-05
        %v392 = vrsqrt.pop %v391
        %v393 = vmul.f32 %v385, %v392
        %v395 = vlaneseq
        %v396 = vshrl.u32 %v395, 7
        %v397 = vsub.s32 0, %v396
        %v398 = vrot.slane %v377, %v397
        %v400 = vmul.f32 %v393, %v398
        %v402 = vlaneseq
        %v403 = vshrl.u32 %v402, 7
        %v404 = vsub.s32 0, %v403
        %v405 = vrot.slane %v378, %v404
        %v407 = vadd.f32 %v400, %v405
        %v408 = vpack.c.bf16 %v407, %v407
        %v409 = vld [vmem:[#allocation5] sm:$0xf]
        %v410 = vld [vmem:[#allocation5 + $0x4] sm:$0xf]
        %v411 = vld [vmem:[#allocation5 + $0x8] sm:$0xf]
        %v412 = vld [vmem:[#allocation5 + $0xc] sm:$0xf]
        %v417 = vunpack.c.l.b16 %v409
        %v418 = vunpack.c.l.b16 %v410
        %v419 = vunpack.c.l.b16 %v411
        %v420 = vunpack.c.l.b16 %v412
        %v421 = vpack.c.b16 %v418, %v417
        %v422 = vpack.c.b16 %v420, %v419
        %v426 = vsel %vm379, %v408, 0
        %428 = vmatprep.subr.bf16.mxu0 0
        %429 = vmatpush1.bf16.msra.mxu0 %v421
        %430 = vmatprep.subr.bf16.mxu0 0
        %431 = vmatpush1.bf16.msra.mxu0 %v422
        %432 = vmatprep.subr.bf16.mxu0 0
        %433 = vmatpush1.bf16.msra.mxu0 0
        %434 = vmatprep.subr.bf16.mxu0 0
        %435 = vmatpush1.bf16.msra.mxu0 0
        %436 = vmatprep.subr.bf16.mxu0 0
        %437 = vmatpush1.bf16.msra.mxu0 0
        %438 = vmatprep.subr.bf16.mxu0 0
        %439 = vmatpush1.bf16.msra.mxu0 0
        %440 = vmatprep.subr.bf16.mxu0 0
        %441 = vmatpush1.bf16.msra.mxu0 0
        %442 = vmatprep.subr.bf16.mxu0 0
        %443 = vmatpush1.bf16.msra.mxu0 0
        %444 = vmatprep.subr.bf16.mxu0 0
        %445 = vmatpush1.bf16.msra.mxu0 0
        %446 = vmatprep.subr.bf16.mxu0 0
        %447 = vmatpush1.bf16.msra.mxu0 0
        %448 = vmatprep.subr.bf16.mxu0 0
        %449 = vmatpush1.bf16.msra.mxu0 0
        %450 = vmatprep.subr.bf16.mxu0 0
        %451 = vmatpush1.bf16.msra.mxu0 0
        %452 = vmatprep.subr.bf16.mxu0 0
        %453 = vmatpush1.bf16.msra.mxu0 0
        %454 = vmatprep.subr.bf16.mxu0 0
        %455 = vmatpush1.bf16.msra.mxu0 0
        %456 = vmatprep.subr.bf16.mxu0 0
        %457 = vmatpush1.bf16.msra.mxu0 0
        %458 = vmatprep.subr.bf16.mxu0 0
        %459 = vmatpush1.bf16.msra.mxu0 0
        %460 = vmatprep.mubr.bf16.mxu0 0
        %461 = vmatmul.mubr.bf16.gmra.mrb[0].mxu0 %v426
        %v462 = vpop.f32.mrb[0].mxu0
        %v463 = vadd.f32 0.0, %v462
        %v464 = vpop.f32.mrb[0].mxu0
        %v465 = vpop.f32.mrb[0].mxu0
        %v466 = vpop.f32.mrb[0].mxu0
        %467 = vdwg.mxu0
        %v468 = vld [vmem:[%s4] sm:$0x1]
        %v469 = vsel %vm379, %v463, 0.0
        %470 = vadd.xlane.f32.xlu0 %v469
        %v471 = vpop.xlane.xlu0 %470
        %v472 = vmul.f32 %v471, %v383
        %v473 = vsub.f32 %v463, %v472
        %v474 = vmul.f32 %v473, %v473
        %v475 = vsel %vm379, %v474, 0.0
        %476 = vadd.xlane.f32.xlu0 %v475
        %v477 = vpop.xlane.xlu0 %476
        %v478 = vmul.f32 %v477, %v383
        %v479 = vadd.f32 %v478, 1e-05
        %v480 = vrsqrt.pop %v479
        %v481 = vmul.f32 %v473, %v480
        %v483 = vlaneseq
        %v484 = vshrl.u32 %v483, 7
        %v485 = vsub.s32 0, %v484
        %v486 = vrot.slane %v468, %v485
        %v488 = vmul.f32 %v481, %v486
        %v489 = vmul.f32 %v488, 0.35355338
        %v490 = vld [vmem:[%s5] sm:$0x1]
        %492 = vrot.lane.b32.xlu0 %v463, 96
        %v493 = vpop.permute.xlu0 %492
        %v495 = vsel %vm379, %v493, 0.0
        %496 = vadd.xlane.f32.xlu0 %v495
        %v497 = vpop.xlane.xlu0 %496
        %v498 = vmul.f32 %v497, %v383
        %v499 = vsub.f32 %v463, %v498
        %v500 = vmul.f32 %v499, %v499
        %502 = vrot.lane.b32.xlu0 %v500, 96
        %v503 = vpop.permute.xlu0 %502
        %v505 = vsel %vm379, %v503, 0.0
        %506 = vadd.xlane.f32.xlu0 %v505
        %v507 = vpop.xlane.xlu0 %506
        %v508 = vmul.f32 %v507, %v383
        %v509 = vadd.f32 %v508, 1e-05
        %v510 = vrsqrt.pop %v509
        %v511 = vmul.f32 %v499, %v510
        %v513 = vlaneseq
        %v514 = vshrl.u32 %v513, 7
        %v515 = vsub.s32 0, %v514
        %v516 = vrot.slane %v490, %v515
        %517 = vrot.lane.b32.xlu0 %v516, 32
        %v518 = vpop.permute.xlu0 %517
        %v520 = vmul.f32 %v511, %v518
        %v521 = vpack.c.bf16 %v489, %v489
        %vm522 = vcmask 60416
        %523 = vst.msk [vmem:[%s360] sm:$0xf] %vm522, %v521
        %v524 = vpack.c.bf16 %v520, %v520
        %v526 = vunpack.c.l.b16 %v524
        %v527 = vpack.c.b16 %v526, %v526
        %528 = vrot.lane.b32.xlu0 %v527, 96
        %v529 = vpop.permute.xlu0 %528
        %531 = vst.msk [vmem:[%s367] sm:$0xf] %vm522, %v529
        %v532 = vpack.c.bf16 %v463, %v463
        %v534 = vunpack.c.l.b16 %v532
        %v535 = vpack.c.b16 %v534, %v534
        %536 = vrot.lane.b32.xlu0 %v535, 64
        %v537 = vpop.permute.xlu0 %536
        %539 = vst.msk [vmem:[%s374] sm:$0xf] %vm522, %v537
        %v541 = vunpack.c.l.b16 %v521
        %v542 = vpack.c.b16 %v541, %v541
        %543 = vrot.lane.b32.xlu0 %v542, 120
        %v544 = vpop.permute.xlu0 %543
        %s546 = scalar_lea.vmem %s360, 4 [#allocation7]
        %547 = vst.msk [vmem:[%s546] sm:$0xf] %vm522, %v544
        %548 = vrot.lane.b32.xlu0 %v527, 88
        %v549 = vpop.permute.xlu0 %548
        %s551 = scalar_lea.vmem %s367, 4 [#allocation8]
        %552 = vst.msk [vmem:[%s551] sm:$0xf] %vm522, %v549
        %553 = vrot.lane.b32.xlu0 %v535, 56
        %v554 = vpop.permute.xlu0 %553
        %s556 = scalar_lea.vmem %s374, 4 [#allocation10]
        %557 = vst.msk [vmem:[%s556] sm:$0xf] %vm522, %v554
        %558 = vrot.lane.b32.xlu0 %v542, 112
        %v559 = vpop.permute.xlu0 %558
        %s561 = scalar_lea.vmem %s360, 8 [#allocation7]
        %562 = vst.msk [vmem:[%s561] sm:$0xf] %vm522, %v559
        %563 = vrot.lane.b32.xlu0 %v527, 80
        %v564 = vpop.permute.xlu0 %563
        %s566 = scalar_lea.vmem %s367, 8 [#allocation8]
        %567 = vst.msk [vmem:[%s566] sm:$0xf] %vm522, %v564
        %568 = vrot.lane.b32.xlu0 %v535, 48
        %v569 = vpop.permute.xlu0 %568
        %s571 = scalar_lea.vmem %s374, 8 [#allocation10]
        %572 = vst.msk [vmem:[%s571] sm:$0xf] %vm522, %v569
        %573 = vrot.lane.b32.xlu0 %v542, 104
        %v574 = vpop.permute.xlu0 %573
        %s576 = scalar_lea.vmem %s360, 12 [#allocation7]
        %577 = vst.msk [vmem:[%s576] sm:$0xf] %vm522, %v574
        %578 = vrot.lane.b32.xlu0 %v527, 72
        %v579 = vpop.permute.xlu0 %578
        %s581 = scalar_lea.vmem %s367, 12 [#allocation8]
        %582 = vst.msk [vmem:[%s581] sm:$0xf] %vm522, %v579
        %583 = vrot.lane.b32.xlu0 %v535, 40
        %v584 = vpop.permute.xlu0 %583
        %s586 = scalar_lea.vmem %s374, 12 [#allocation10]
        %587 = vst.msk [vmem:[%s586] sm:$0xf] %vm522, %v584
        %s588 = sand.u32 %s185, 1
        %s589 = scalar_lea.sflag [#allocation4], %s588
        %s590 = sand.u32 %s185, 1
        %s591 = smul.addr %s590, 16
        %s592 = scalar_lea.vmem [#allocation7], %s591
        %s593 = sand.u32 %s30, 1
        %s594 = scalar_lea.sflag [#allocation9], %s593
        %s595 = sand.u32 %s213, 1
        %s596 = smul.addr %s595, 16
        %s597 = scalar_lea.vmem [#allocation8], %s596
        %s598 = sand.u32 %s30, 1
        %s599 = scalar_lea.sflag [#allocation9], %s598
        %s600 = sand.u32 %s241, 1
        %s601 = smul.addr %s600, 16
        %s602 = scalar_lea.vmem [#allocation10], %s601
        // Predicated region
        $region53: #{tpu_custom_call.1} parent=43 // pred_check
          %p603 = pneg %p195
        $region54: #{tpu_custom_call.1} parent=43 // pred_check_branch
          %605 = sbr.rel (%p603) target = $region56
        $region55: #{tpu_custom_call.1} parent=43 // pred_region
          %s607 = ssub.s32 256, 256
          %608 = vsyncadd %s589, %s607
          %s609 = smul.addr %s34, 4
          %s610 = sadd.s32 %s35, %s609
          %s611 = smul.addr %s610, 64
          %s612 = scalar_lea.hbm %s6, %s611
          %s613 = sshll.u32 %s592, 4
          %s614 = int_to_ptr.vmem [resolvable:$true] %s613
          %619 = dma.vmem_to_hbm [thread:$0]  %s614, 256, %s612, %s589, 64, 64, 4
        $region56: #{tpu_custom_call.1} parent=43 // pred_fallthru
          _
        // Predicated region
        $region57: #{tpu_custom_call.1} parent=43 // pred_check
          %p620 = pneg %p223
        $region58: #{tpu_custom_call.1} parent=43 // pred_check_branch
          %622 = sbr.rel (%p620) target = $region60
        $region59: #{tpu_custom_call.1} parent=43 // pred_region
          %s624 = ssub.s32 256, 256
          %625 = vsyncadd %s594, %s624
          %s626 = smul.addr %s34, 4
          %s627 = sadd.s32 %s35, %s626
          %s628 = smul.addr %s627, 64
          %s629 = scalar_lea.hbm %s7, %s628
          %s630 = sshll.u32 %s597, 4
          %s631 = int_to_ptr.vmem [resolvable:$true] %s630
          %636 = dma.vmem_to_hbm [thread:$0]  %s631, 256, %s629, %s594, 64, 64, 4
        $region60: #{tpu_custom_call.1} parent=43 // pred_fallthru
          _
        // Predicated region
        $region61: #{tpu_custom_call.1} parent=43 // pred_check
          %p637 = pneg %p251
        $region62: #{tpu_custom_call.1} parent=43 // pred_check_branch
          %639 = sbr.rel (%p637) target = $region64
        $region63: #{tpu_custom_call.1} parent=43 // pred_region
          %s641 = ssub.s32 256, 256
          %642 = vsyncadd %s599, %s641
          %s643 = smul.addr %s34, 4
          %s644 = sadd.s32 %s35, %s643
          %s645 = smul.addr %s644, 64
          %s646 = scalar_lea.hbm %s8, %s645
          %s647 = sshll.u32 %s602, 4
          %s648 = int_to_ptr.vmem [resolvable:$true] %s647
          %653 = dma.vmem_to_hbm [thread:$0]  %s648, 256, %s646, %s599, 64, 64, 4
        $region64: #{tpu_custom_call.1} parent=43 // pred_fallthru
          _
      $region44: #{tpu_custom_call.1} parent=5 // pred_fallthru
        _
      %p654 = scmp.le.s32.totalorder 2, %s25
      // Predicated region
      $region65: #{tpu_custom_call.1} parent=5 // pred_check
        %p655 = pneg %p654
      $region66: #{tpu_custom_call.1} parent=5 // pred_check_branch
        %657 = sbr.rel (%p655) target = $region68
      $region67: #{tpu_custom_call.1} parent=5 // pred_region
        %s658 = ssub.s32 %s25, 2
        // Predicated region
        $region69: #{tpu_custom_call.1} parent=67 // pred_check
          %p659 = pneg %p201
        $region70: #{tpu_custom_call.1} parent=67 // pred_check_branch
          %661 = sbr.rel (%p659) target = $region72
        $region71: #{tpu_custom_call.1} parent=67 // pred_region
          %s662 = sand.u32 %s186, 1
          %s663 = scalar_lea.sflag [#allocation4], %s662
          %s664 = sand.u32 %s186, 1
          %s665 = smul.addr %s664, 16
          %s666 = scalar_lea.vmem [#allocation7], %s665
          %667 = dma.done %s663, 256
        $region72: #{tpu_custom_call.1} parent=67 // pred_fallthru
          _
        // Predicated region
        $region73: #{tpu_custom_call.1} parent=67 // pred_check
          %p668 = pneg %p229
        $region74: #{tpu_custom_call.1} parent=67 // pred_check_branch
          %670 = sbr.rel (%p668) target = $region76
        $region75: #{tpu_custom_call.1} parent=67 // pred_region
          %s671 = sand.u32 %s31, 1
          %s672 = scalar_lea.sflag [#allocation9], %s671
          %s673 = sand.u32 %s214, 1
          %s674 = smul.addr %s673, 16
          %s675 = scalar_lea.vmem [#allocation8], %s674
          %676 = dma.done %s672, 256
        $region76: #{tpu_custom_call.1} parent=67 // pred_fallthru
          _
        // Predicated region
        $region77: #{tpu_custom_call.1} parent=67 // pred_check
          %p677 = pneg %p257
        $region78: #{tpu_custom_call.1} parent=67 // pred_check_branch
          %679 = sbr.rel (%p677) target = $region80
        $region79: #{tpu_custom_call.1} parent=67 // pred_region
          %s680 = sand.u32 %s31, 1
          %s681 = scalar_lea.sflag [#allocation9], %s680
          %s682 = sand.u32 %s242, 1
          %s683 = smul.addr %s682, 16
          %s684 = scalar_lea.vmem [#allocation10], %s683
          %685 = dma.done %s681, 256
        $region80: #{tpu_custom_call.1} parent=67 // pred_fallthru
          _
      $region68: #{tpu_custom_call.1} parent=5 // pred_fallthru
        _
    $region6: #{tpu_custom_call.1} parent=1 // loop_footer
      %s29 = sadd.s32 1, %s25
    $region7: #{tpu_custom_call.1} parent=1 // loop_footer_branch
      %24 = sbr.rel target = $region3
    $region8: #{tpu_custom_call.1} parent=1 // loop_exit
      _
    %686 = vsyncpa [#allocation3], 1
    %s687 = scalar_lea.sflag [#allocation3], 1
    %688 = vsyncpa %s687, 1
    %689 = vsyncpa [#allocation6], 1
    %690 = vsyncpa [#allocation4], 1
    %s691 = scalar_lea.sflag [#allocation4], 1
    %692 = vsyncpa %s691, 1
    %693 = vsyncpa [#allocation9], 1
    %s694 = scalar_lea.sflag [#allocation9], 1
    %695 = vsyncpa %s694, 1

</llo_original>
